<compile_context>
chip_gen: v6e
topology: v6e:2x2x1
jax: 0.10.0
libtpu: 0.0.40
codegen_flags: <defaults>
</compile_context>

<pallas_src>
import functools
import math

import jax
import jax.numpy as jnp
from jax.experimental import pallas as pl
from jax.experimental.pallas import tpu as pltpu


# --------------------------------------------------------------------------- #
# Pallas kernels
# --------------------------------------------------------------------------- #
def _bn_stats_kernel(xf_ref, mean_ref, rstd_ref, *, eps, inv_n):
    # grid=(B,) reduction: per-channel sum / sumsq accumulated into the
    # resident (C, 1) output blocks; finalized on the last grid step.
    b = pl.program_id(0)

    @pl.when(b == 0)
    def _():
        mean_ref[...] = jnp.zeros_like(mean_ref)
        rstd_ref[...] = jnp.zeros_like(rstd_ref)

    x = xf_ref[0]                                              # (C, HW)
    mean_ref[...] += jnp.sum(x, axis=1, keepdims=True)
    rstd_ref[...] += jnp.sum(x * x, axis=1, keepdims=True)

    @pl.when(b == pl.num_programs(0) - 1)
    def _():
        m = mean_ref[...] * inv_n
        v = rstd_ref[...] * inv_n - m * m                      # biased var (PyTorch BN fwd)
        mean_ref[...] = m
        rstd_ref[...] = jax.lax.rsqrt(v + eps)


def _fused_dynw_conv_kernel(xf_ref, mean_ref, rstd_ref, wq_ref, wk_ref,
                            wbank_ref, bias_ref, out_ref, *, temp, H, W, K):
    # One batch per program: BN normalize + 1x1 Q/K + spatial attention +
    # kernel mixing, then the depthwise 'same' conv of the ORIGINAL x with the
    # just-computed dynamic K*K kernels — all in one VMEM residency of x.
    hp = jax.lax.Precision.HIGHEST
    x = xf_ref[0]                                              # (C, HW), original input
    xbn = (x - mean_ref[...]) * rstd_ref[...]                  # BN (gamma=1, beta=0 at init)

    # TODO(synk): at production sizes consider bf16 MXU inputs
    # (preferred_element_type=f32) and tiling HW for v7x's 64 MiB VMEM.
    q = jnp.dot(wq_ref[...], xbn, precision=hp,
                preferred_element_type=jnp.float32)            # (C, HW)   1x1 conv
    k = jnp.dot(wk_ref[...], xbn, precision=hp,
                preferred_element_type=jnp.float32)            # (NK, HW)  1x1 conv
    attn = jax.lax.dot_general(q, k, (((1,), (1,)), ((), ())),
                               precision=hp,
                               preferred_element_type=jnp.float32)  # (C, NK)
    attn = attn * (1.0 / temp)
    attn = attn - jnp.max(attn, axis=-1, keepdims=True)
    e = jnp.exp(attn)
    score = e / jnp.sum(e, axis=-1, keepdims=True)             # softmax over n_kernels
    dynw = jnp.dot(score, wbank_ref[...], precision=hp,
                   preferred_element_type=jnp.float32)         # (C, K*K), stays VMEM-resident

    # Depthwise 'same' cross-correlation, lane-dense (C, HW) layout.
    HW = H * W
    pad = (K - 1) // 2
    lane = jax.lax.broadcasted_iota(jnp.int32, (1, HW), 1)
    h_idx = lane // W
    w_idx = lane % W

    acc = jnp.zeros_like(x)
    for i in range(K):
        for j in range(K):
            di = i - pad
            dj = j - pad
            s = di * W + dj
            shifted = x if s == 0 else pltpu.roll(x, shift=(-s) % HW, axis=1)
            mask = None
            if di != 0:
                mask = (h_idx + di >= 0) & (h_idx + di < H)
            if dj != 0:
                wmask = (w_idx + dj >= 0) & (w_idx + dj < W)
                mask = wmask if mask is None else (mask & wmask)
            tap = shifted if mask is None else jnp.where(mask, shifted, 0.0)
            t = i * K + j
            acc = acc + tap * dynw[:, t:t + 1]                 # (C,1) lane-broadcast

    out_ref[0] = acc + bias_ref[...]                           # per-channel bias


# --------------------------------------------------------------------------- #
# Wrapper (glue = contiguous reshapes only; no pad / transpose copies of x)
# --------------------------------------------------------------------------- #
def self_dw_conv2d(x, wq, wk, wbank, bias, *, kernel_size, eps=1e-5):
    B, C, H, W = x.shape
    NK = wk.shape[0]
    KK = kernel_size * kernel_size
    assert kernel_size % 2 == 1, "padding='same' implemented for odd kernel_size"
    HW = H * W
    temp = float(C * 2)

    x_flat = x.reshape(B, C, HW)          # free view of contiguous NCHW
    bias_col = bias.reshape(C, 1)

    # 1) BatchNorm batch statistics (training-mode forward), streamed over B.
    mean, rstd = pl.pallas_call(
        functools.partial(_bn_stats_kernel, eps=eps, inv_n=1.0 / (B * HW)),
        out_shape=(jax.ShapeDtypeStruct((C, 1), jnp.float32),
                   jax.ShapeDtypeStruct((C, 1), jnp.float32)),
        grid=(B,),
        in_specs=[pl.BlockSpec((1, C, HW), lambda b: (b, 0, 0))],
        out_specs=(pl.BlockSpec((C, 1), lambda b: (0, 0)),
                   pl.BlockSpec((C, 1), lambda b: (0, 0))),
        compiler_params=pltpu.CompilerParams(dimension_semantics=("arbitrary",)),
    )(x_flat)

    # 2) Fused: dynamic-kernel generation + depthwise 'same' conv, one program
    #    per batch, lane-dense (B, C, H*W) output.
    out_flat = pl.pallas_call(
        functools.partial(_fused_dynw_conv_kernel, temp=temp,
                          H=H, W=W, K=kernel_size),
        out_shape=jax.ShapeDtypeStruct((B, C, HW), jnp.float32),
        grid=(B,),
        in_specs=[
            pl.BlockSpec((1, C, HW), lambda b: (b, 0, 0)),   # x (original)
            pl.BlockSpec((C, 1), lambda b: (0, 0)),          # mean
            pl.BlockSpec((C, 1), lambda b: (0, 0)),          # rstd
            pl.BlockSpec((C, C), lambda b: (0, 0)),          # wq
            pl.BlockSpec((NK, C), lambda b: (0, 0)),         # wk
            pl.BlockSpec((NK, KK), lambda b: (0, 0)),        # weight bank
            pl.BlockSpec((C, 1), lambda b: (0, 0)),          # bias
        ],
        out_specs=pl.BlockSpec((1, C, HW), lambda b: (b, 0, 0)),
        compiler_params=pltpu.CompilerParams(dimension_semantics=("parallel",)),
    )(x_flat, mean, rstd, wq, wk, wbank, bias_col)

    return out_flat.reshape(B, C, H, W)


# --------------------------------------------------------------------------- #
# Pure-JAX reference (mirrors the PyTorch forward, training-mode BN)
# --------------------------------------------------------------------------- #
def reference_forward(x, wq, wk, wbank, bias, kernel_size, eps=1e-5):
    B, C, H, W = x.shape
    temp = C * 2
    hp = jax.lax.Precision.HIGHEST
    mean = jnp.mean(x, axis=(0, 2, 3), keepdims=True)
    var = jnp.mean((x - mean) ** 2, axis=(0, 2, 3), keepdims=True)
    xbn = (x - mean) / jnp.sqrt(var + eps)
    q = jnp.einsum('oc,bchw->bohw', wq, xbn, precision=hp).reshape(B, C, H * W)
    k = jnp.einsum('nc,bchw->bnhw', wk, xbn, precision=hp).reshape(B, wk.shape[0], H * W)
    k = jnp.transpose(k, (0, 2, 1))
    attn = jnp.matmul(q, k, precision=hp) / temp
    score = jax.nn.softmax(attn, axis=-1)
    dynw = jnp.matmul(score, wbank, precision=hp).reshape(B, C, kernel_size, kernel_size)
    pad = (kernel_size - 1) // 2
    xp = jnp.pad(x, ((0, 0), (0, 0), (pad, pad), (pad, pad)))
    out = jnp.zeros((B, C, H, W), jnp.float32)
    for i in range(kernel_size):
        for j in range(kernel_size):
            out = out + xp[:, :, i:i + H, j:j + W] * dynw[:, :, i, j][:, :, None, None]
    return out + bias[None, :, None, None]


# --------------------------------------------------------------------------- #
if __name__ == "__main__":
    B, C, H, W = 2, 4, 16, 16
    kernel_size, n_kernels = 3, 4
    KK = kernel_size * kernel_size

    key = jax.random.PRNGKey(0)
    kx, kq, kk_, kw = jax.random.split(key, 4)
    x = jax.random.normal(kx, (B, C, H, W), dtype=jnp.float32)
    # Deterministic parameter init (shapes from the module's __init__):
    wq = jax.random.normal(kq, (C, C), dtype=jnp.float32) / math.sqrt(C)           # q_layer 1x1 conv
    wk = jax.random.normal(kk_, (n_kernels, C), dtype=jnp.float32) / math.sqrt(C)  # k_layer 1x1 conv
    wbank = jax.random.normal(kw, (n_kernels, KK), dtype=jnp.float32)              # self.weight
    bias = jnp.zeros((C,), dtype=jnp.float32)                                      # self.Bias
    # TODO(synk): BatchNorm running-mean/var buffer updates are stateful and not
    # reproduced (they do not affect this forward output); gamma=1, beta=0 at init.

    out = self_dw_conv2d(x, wq, wk, wbank, bias, kernel_size=kernel_size)
    out = jax.block_until_ready(out)

    ref = reference_forward(x, wq, wk, wbank, bias, kernel_size)
    assert out.shape == (B, C, H, W)
    assert jnp.allclose(out, ref, atol=1e-3, rtol=1e-3), float(jnp.max(jnp.abs(out - ref)))
    print("KERNEL_OK")
</pallas_src>

<mosaic_0001>
module attributes {stable_mosaic.version = 11 : i64} {
  func.func @_bn_stats_kernel(%arg0: i32, %arg1: memref<1x4x256xf32, #tpu.memory_space<vmem>>, %arg2: memref<4x1xf32, #tpu.memory_space<vmem>>, %arg3: memref<4x1xf32, #tpu.memory_space<vmem>>) attributes {dimension_semantics = [#tpu.dimension_semantics<arbitrary>], iteration_bounds = array<i64: 2>, scalar_prefetch = 0 : i64, scratch_operands = 0 : i64, tpu.core_type = #tpu.core_type<tc>, window_params = [{transform_indices = @transform_0, window_bounds = array<i64: 1, 4, 256>}, {pipeline_mode = #tpu.pipeline_mode<synchronous>, transform_indices = @transform_1, window_bounds = array<i64: 4, 1>}, {pipeline_mode = #tpu.pipeline_mode<synchronous>, transform_indices = @transform_2, window_bounds = array<i64: 4, 1>}]} {
    %c0_i32 = arith.constant 0 : i32
    %0 = arith.cmpi eq, %arg0, %c0_i32 : i32
    %1 = arith.extui %0 : i1 to i32
    %c0_i32_0 = arith.constant 0 : i32
    %2 = arith.cmpi ne, %1, %c0_i32_0 : i32
    scf.if %2 {
      %cst_13 = arith.constant 0.000000e+00 : f32
      %19 = vector.broadcast %cst_13 : f32 to vector<4x1xf32>
      %c0_14 = arith.constant 0 : index
      %c0_15 = arith.constant 0 : index
      %20 = vector.load %arg2[%c0_14, %c0_15] : memref<4x1xf32, #tpu.memory_space<vmem>>, vector<4x1xf32>
      tpu.vector_store %arg2[%c0_14, %c0_15], %19 {strides = array<i32>} : memref<4x1xf32, #tpu.memory_space<vmem>>, vector<4x1xf32>,
      %cst_16 = arith.constant 0.000000e+00 : f32
      %21 = vector.broadcast %cst_16 : f32 to vector<4x1xf32>
      %c0_17 = arith.constant 0 : index
      %c0_18 = arith.constant 0 : index
      %22 = vector.load %arg3[%c0_17, %c0_18] : memref<4x1xf32, #tpu.memory_space<vmem>>, vector<4x1xf32>
      tpu.vector_store %arg3[%c0_17, %c0_18], %21 {strides = array<i32>} : memref<4x1xf32, #tpu.memory_space<vmem>>, vector<4x1xf32>,
    } else {
    }
    %c0 = arith.constant 0 : index
    %c0_1 = arith.constant 0 : index
    %c0_2 = arith.constant 0 : index
    %3 = vector.load %arg1[%c0, %c0_1, %c0_2] : memref<1x4x256xf32, #tpu.memory_space<vmem>>, vector<1x4x256xf32>
    %4 = vector.shape_cast %3 : vector<1x4x256xf32> to vector<4x256xf32>
    %c0_3 = arith.constant 0 : index
    %c0_4 = arith.constant 0 : index
    %5 = vector.load %arg2[%c0_3, %c0_4] : memref<4x1xf32, #tpu.memory_space<vmem>>, vector<4x1xf32>
    %cst = arith.constant dense<0.000000e+00> : vector<4xf32>
    %6 = vector.multi_reduction <add>, %4, %cst [1] : vector<4x256xf32> to vector<4xf32>
    %7 = vector.shape_cast %6 : vector<4xf32> to vector<4x1xf32>
    %8 = arith.addf %5, %7 : vector<4x1xf32>
    %c0_5 = arith.constant 0 : index
    %c0_6 = arith.constant 0 : index
    %9 = vector.load %arg2[%c0_5, %c0_6] : memref<4x1xf32, #tpu.memory_space<vmem>>, vector<4x1xf32>
    tpu.vector_store %arg2[%c0_5, %c0_6], %8 {strides = array<i32>} : memref<4x1xf32, #tpu.memory_space<vmem>>, vector<4x1xf32>,
    %c0_7 = arith.constant 0 : index
    %c0_8 = arith.constant 0 : index
    %10 = vector.load %arg3[%c0_7, %c0_8] : memref<4x1xf32, #tpu.memory_space<vmem>>, vector<4x1xf32>
    %11 = arith.mulf %4, %4 : vector<4x256xf32>
    %cst_9 = arith.constant dense<0.000000e+00> : vector<4xf32>
    %12 = vector.multi_reduction <add>, %11, %cst_9 [1] : vector<4x256xf32> to vector<4xf32>
    %13 = vector.shape_cast %12 : vector<4xf32> to vector<4x1xf32>
    %14 = arith.addf %10, %13 : vector<4x1xf32>
    %c0_10 = arith.constant 0 : index
    %c0_11 = arith.constant 0 : index
    %15 = vector.load %arg3[%c0_10, %c0_11] : memref<4x1xf32, #tpu.memory_space<vmem>>, vector<4x1xf32>
    tpu.vector_store %arg3[%c0_10, %c0_11], %14 {strides = array<i32>} : memref<4x1xf32, #tpu.memory_space<vmem>>, vector<4x1xf32>,
    %c1_i32 = arith.constant 1 : i32
    %16 = arith.cmpi eq, %arg0, %c1_i32 : i32
    %17 = arith.extui %16 : i1 to i32
    %c0_i32_12 = arith.constant 0 : i32
    %18 = arith.cmpi ne, %17, %c0_i32_12 : i32
    scf.if %18 {
      %c0_13 = arith.constant 0 : index
      %c0_14 = arith.constant 0 : index
      %19 = vector.load %arg2[%c0_13, %c0_14] : memref<4x1xf32, #tpu.memory_space<vmem>>, vector<4x1xf32>
      %cst_15 = arith.constant 0.001953125 : f32
      %20 = vector.broadcast %cst_15 : f32 to vector<4x1xf32>
      %21 = arith.mulf %19, %20 : vector<4x1xf32>
      %c0_16 = arith.constant 0 : index
      %c0_17 = arith.constant 0 : index
      %22 = vector.load %arg3[%c0_16, %c0_17] : memref<4x1xf32, #tpu.memory_space<vmem>>, vector<4x1xf32>
      %cst_18 = arith.constant 0.001953125 : f32
      %23 = vector.broadcast %cst_18 : f32 to vector<4x1xf32>
      %24 = arith.mulf %22, %23 : vector<4x1xf32>
      %25 = arith.mulf %21, %21 : vector<4x1xf32>
      %26 = arith.subf %24, %25 : vector<4x1xf32>
      %c0_19 = arith.constant 0 : index
      %c0_20 = arith.constant 0 : index
      %27 = vector.load %arg2[%c0_19, %c0_20] : memref<4x1xf32, #tpu.memory_space<vmem>>, vector<4x1xf32>
      tpu.vector_store %arg2[%c0_19, %c0_20], %21 {strides = array<i32>} : memref<4x1xf32, #tpu.memory_space<vmem>>, vector<4x1xf32>,
      %cst_21 = arith.constant 9.99999974E-6 : f32
      %28 = vector.broadcast %cst_21 : f32 to vector<4x1xf32>
      %29 = arith.addf %26, %28 : vector<4x1xf32>
      %30 = math.rsqrt %29 : vector<4x1xf32>
      %c0_22 = arith.constant 0 : index
      %c0_23 = arith.constant 0 : index
      %31 = vector.load %arg3[%c0_22, %c0_23] : memref<4x1xf32, #tpu.memory_space<vmem>>, vector<4x1xf32>
      tpu.vector_store %arg3[%c0_22, %c0_23], %30 {strides = array<i32>} : memref<4x1xf32, #tpu.memory_space<vmem>>, vector<4x1xf32>,
    } else {
    }
    return
  }
  func.func @transform_0(%arg0: i32) -> (i32, i32, i32) {
    %c0_i32 = arith.constant 0 : i32
    %c0_i32_0 = arith.constant 0 : i32
    %c0_i32_1 = arith.constant 0 : i32
    return %arg0, %c0_i32, %c0_i32_0 : i32, i32, i32
  }
  func.func @transform_1(%arg0: i32) -> (i32, i32) {
    %c0_i32 = arith.constant 0 : i32
    %c0_i32_0 = arith.constant 0 : i32
    %c0_i32_1 = arith.constant 0 : i32
    return %c0_i32, %c0_i32_0 : i32, i32
  }
  func.func @transform_2(%arg0: i32) -> (i32, i32) {
    %c0_i32 = arith.constant 0 : i32
    %c0_i32_0 = arith.constant 0 : i32
    %c0_i32_1 = arith.constant 0 : i32
    return %c0_i32, %c0_i32_0 : i32, i32
  }
}

</mosaic_0001>

<llo_original>
// kernel: tpu_custom_call.1
$region0: #{tpu_custom_call.1}
  #allocation0 [shape = 'u32[]', space=smem, size = 0x4, offset = 0x4, fixed_abs, tag = 'smem constant byte address 0x4 - core index']
  #allocation1 [shape = 'u32[144,128]{1,0:T(1,128)}', space=vmem, size = 0x12000, scoped, tag = 'internal scratch']
  %s0 = inlined_call_operand.hbm [shape: f32[2,4,256], index: 0, kind: input, shape index: {}]
  %s1 = inlined_call_operand.vmem [shape: f32[4,1], index: 1, kind: output, shape index: {0}]
  %s2 = inlined_call_operand.vmem [shape: f32[4,1], index: 2, kind: output, shape index: {1}]
  %3 = xla_tuple %s1, %s2
  %s4 = sld [smem:[#allocation0]]
  $region57: #{tpu_custom_call.1} parent=0
    _
  %s6 = ssub.s32 1, %s4
  %s7 = scalar_select 0, %s6, %s4
  $region1: #{tpu_custom_call.1} parent=0
    #allocation2 [shape = 'u8[8192]{0}', space=vmem, size = 0x2000, scoped, tag = 'input window, operand 0']
    #allocation3 [shape = 's32[2]{0}', space=sflag, size = 0x8, scoped, tag = 'scoped memory for tpu_custom_call.1']
    %8 = vsyncpa [#allocation3], 0
    %s9 = scalar_lea.sflag [#allocation3], 1
    %10 = vsyncpa %s9, 0
    loop: start=0, step=1, limit=4
    $region2: #{tpu_custom_call.1} parent=1 // loop_pre_header
      _
    $region3: #{tpu_custom_call.1} parent=1 // loop_header
      %s12 = sphi 0, %s16
      %p13 = scmp.ge.s32.totalorder %s12, 4
      %s22 = sphi 0, %s24
      %s25 = sphi 0, %s22
      %s26 = sphi 0, %s25
      %s42 = sphi 0, %s26
      %s46 = sphi 0, %s46
      %s48 = sphi 0, %s46
      %s49 = sphi 0, %s48
      %s63 = sphi 0, %s49
      %s67 = sphi 0, %s67
      %s69 = sphi 0, %s67
      %s70 = sphi 0, %s69
      %s84 = sphi 0, %s70
    $region4: #{tpu_custom_call.1} parent=1 // loop_header_branch
      %15 = sbr.rel (%p13) target = $region8
    $region5: #{tpu_custom_call.1} parent=1 // loop_body
      %s17 = ssub.s32 %s12, 1
      %s18 = ssub.s32 %s12, 2
      %s19 = sadd.s32 %s12, 1
      %s20 = ssub.s32 %s12, %s19
      %p21 = scmp.eq.s32.totalorder %s20, 0
      %s23 = sadd.s32 %s22, 1
      %s24 = scalar_select %p21, %s22, %s23
      %p27 = pneg %p21
      %p28 = scmp.eq.s32.totalorder %s12, 1
      %p29 = por %p27, %p28
      %p30 = scmp.ne.s32.totalorder %s22, %s25
      %p31 = scmp.eq.s32.totalorder %s12, 0
      %p32 = por %p30, %p31
      %p33 = scmp.ne.s32.totalorder %s22, %s25
      %p34 = scmp.eq.s32.totalorder %s17, 1
      %p35 = por %p33, %p34
      %p36 = scmp.ne.s32.totalorder %s25, %s26
      %p37 = scmp.eq.s32.totalorder %s17, 0
      %p38 = por %p36, %p37
      %p39 = scmp.ne.s32.totalorder %s25, %s26
      %p40 = scmp.eq.s32.totalorder %s18, 1
      %p41 = por %p39, %p40
      %p43 = scmp.ne.s32.totalorder %s26, %s42
      %p44 = scmp.eq.s32.totalorder %s18, 0
      %p45 = por %p43, %p44
      %s47 = sadd.s32 %s46, 1
      %p50 = scmp.eq.s32.totalorder %s12, 1
      %p51 = scmp.ne.s32.totalorder %s46, %s48
      %p52 = scmp.eq.s32.totalorder %s12, 0
      %p53 = por %p51, %p52
      %p54 = scmp.ne.s32.totalorder %s46, %s48
      %p55 = scmp.eq.s32.totalorder %s17, 1
      %p56 = por %p54, %p55
      %p57 = scmp.ne.s32.totalorder %s48, %s49
      %p58 = scmp.eq.s32.totalorder %s17, 0
      %p59 = por %p57, %p58
      %p60 = scmp.ne.s32.totalorder %s48, %s49
      %p61 = scmp.eq.s32.totalorder %s18, 1
      %p62 = por %p60, %p61
      %p64 = scmp.ne.s32.totalorder %s49, %s63
      %p65 = scmp.eq.s32.totalorder %s18, 0
      %p66 = por %p64, %p65
      %s68 = sadd.s32 %s67, 1
      %p71 = scmp.eq.s32.totalorder %s12, 1
      %p72 = scmp.ne.s32.totalorder %s67, %s69
      %p73 = scmp.eq.s32.totalorder %s12, 0
      %p74 = por %p72, %p73
      %p75 = scmp.ne.s32.totalorder %s67, %s69
      %p76 = scmp.eq.s32.totalorder %s17, 1
      %p77 = por %p75, %p76
      %p78 = scmp.ne.s32.totalorder %s69, %s70
      %p79 = scmp.eq.s32.totalorder %s17, 0
      %p80 = por %p78, %p79
      %p81 = scmp.ne.s32.totalorder %s69, %s70
      %p82 = scmp.eq.s32.totalorder %s18, 1
      %p83 = por %p81, %p82
      %p85 = scmp.ne.s32.totalorder %s70, %s84
      %p86 = scmp.eq.s32.totalorder %s18, 0
      %p87 = por %p85, %p86
      %p88 = scmp.le.s32.totalorder 1, %s12
      %p89 = scmp.lt.s32.totalorder %s12, 3
      %p90 = pnand %p88, %p89
      %p91 = pneg %p90
      // Predicated region
      $region9: #{tpu_custom_call.1} parent=5 // pred_check
        _
      $region10: #{tpu_custom_call.1} parent=5 // pred_check_branch
        %93 = sbr.rel (%p90) target = $region12
      $region11: #{tpu_custom_call.1} parent=5 // pred_region
        %s94 = ssub.s32 %s12, 1
      $region12: #{tpu_custom_call.1} parent=5 // pred_fallthru
        _
      %p95 = scmp.lt.s32.totalorder %s12, 2
      // Predicated region
      $region13: #{tpu_custom_call.1} parent=5 // pred_check
        %p96 = pneg %p95
      $region14: #{tpu_custom_call.1} parent=5 // pred_check_branch
        %98 = sbr.rel (%p96) target = $region16
      $region15: #{tpu_custom_call.1} parent=5 // pred_region
        // Predicated region
        $region17: #{tpu_custom_call.1} parent=15 // pred_check
          %p99 = pneg %p32
        $region18: #{tpu_custom_call.1} parent=15 // pred_check_branch
          %101 = sbr.rel (%p99) target = $region20
        $region19: #{tpu_custom_call.1} parent=15 // pred_region
          %s102 = sand.u32 %s22, 1
          %s103 = scalar_lea.sflag [#allocation3], %s102
          %s104 = sand.u32 %s22, 1
          %s105 = smul.addr %s104, 8
          %s106 = scalar_lea.vmem [#allocation2], %s105
          %s108 = ssub.s32 128, 128
          %109 = vsyncadd %s103, %s108
          %s110 = smul.addr %s12, 2
          %s111 = smul.addr %s110, 64
          %s112 = scalar_lea.hbm %s0, %s111
          %s114 = sshll.u32 %s106, 4
          %s115 = int_to_ptr.vmem [resolvable:$true] %s114
          %117 = dma.hbm_to_vmem [thread:$0]  %s112, 128, %s115, %s103
        $region20: #{tpu_custom_call.1} parent=15 // pred_fallthru
          _
      $region16: #{tpu_custom_call.1} parent=5 // pred_fallthru
        _
      %p118 = scmp.le.s32.totalorder 1, %s12
      %p119 = scmp.lt.s32.totalorder %s12, 3
      %p120 = pnand %p118, %p119
      %p121 = pneg %p120
      // Predicated region
      $region21: #{tpu_custom_call.1} parent=5 // pred_check
        _
      $region22: #{tpu_custom_call.1} parent=5 // pred_check_branch
        %123 = sbr.rel (%p120) target = $region24
      $region23: #{tpu_custom_call.1} parent=5 // pred_region
        %s124 = ssub.s32 %s12, 1
        %s125 = sand.u32 %s25, 1
        %s126 = scalar_lea.sflag [#allocation3], %s125
        %s127 = sand.u32 %s25, 1
        %s128 = smul.addr %s127, 8
        %s129 = scalar_lea.vmem [#allocation2], %s128
        // Predicated region
        $region25: #{tpu_custom_call.1} parent=23 // pred_check
          %p130 = pneg %p38
        $region26: #{tpu_custom_call.1} parent=23 // pred_check_branch
          %132 = sbr.rel (%p130) target = $region28
        $region27: #{tpu_custom_call.1} parent=23 // pred_region
          %133 = dma.done %s126, 128
        $region28: #{tpu_custom_call.1} parent=23 // pred_fallthru
          _
        %s134 = sand.u32 %s25, 1
        %s135 = scalar_lea.sflag [#allocation3], %s134
        %s136 = sand.u32 %s25, 1
        %s137 = smul.addr %s136, 8
        %s138 = scalar_lea.vmem [#allocation2], %s137
        %p139 = pneg %p38
        %p140 = pneg %p35
        %p141 = pneg %p59
        %p142 = pneg %p56
        %p143 = pneg %p80
        %p144 = pneg %p77
        %p145 = scmp.eq.s32.totalorder %s17, 0
        // Predicated region
        $region29: #{tpu_custom_call.1} parent=23 // pred_check
          %p146 = pneg %p145
        $region30: #{tpu_custom_call.1} parent=23 // pred_check_branch
          %148 = sbr.rel (%p146) target = $region32
        $region31: #{tpu_custom_call.1} parent=23 // pred_region
          %vm149 = vcmask 3072
          %150 = vst.msk [vmem:[%s1] sm:$0xf] %vm149, 0.0
          %151 = vst.msk [vmem:[%s2] sm:$0xf] %vm149, 0.0
        $region32: #{tpu_custom_call.1} parent=23 // pred_fallthru
          _
        %v152 = vld [vmem:[%s129] sm:$0xff]
        %v153 = vld [vmem:[%s1] sm:$0xf]
        %v155 = vcombine.high %v152, %v152
        %vm157 = vcmask 1043456
        %v158 = vsel %vm157, %v152, 0.0
        %v159 = vsel %vm157, %v155, 0.0
        %v160 = vadd.f32 %v158, %v159
        %161 = vadd.xlane.f32.xlu0 %v160
        %v162 = vpop.xlane.xlu0 %161
        %v163 = vadd.f32 %v153, %v162
        %vm164 = vcmask 3072
        %165 = vst.msk [vmem:[%s1] sm:$0xf] %vm164, %v163
        %v166 = vld [vmem:[%s2] sm:$0xf]
        %v167 = vmul.f32 %v152, %v152
        %v169 = vcombine.high %v167, %v167
        %v171 = vsel %vm157, %v167, 0.0
        %v172 = vsel %vm157, %v169, 0.0
        %v173 = vadd.f32 %v171, %v172
        %174 = vadd.xlane.f32.xlu0 %v173
        %v175 = vpop.xlane.xlu0 %174
        %v176 = vadd.f32 %v166, %v175
        %177 = vst.msk [vmem:[%s2] sm:$0xf] %vm164, %v176
        %p178 = scmp.eq.s32.totalorder %s17, 1
        // Predicated region
        $region33: #{tpu_custom_call.1} parent=23 // pred_check
          %p179 = pneg %p178
        $region34: #{tpu_custom_call.1} parent=23 // pred_check_branch
          %181 = sbr.rel (%p179) target = $region36
        $region35: #{tpu_custom_call.1} parent=23 // pred_region
          %v182 = vld [vmem:[%s1] sm:$0xf]
          %v183 = vmul.f32 %v182, 0.001953125
          %v184 = vld [vmem:[%s2] sm:$0xf]
          %v185 = vmul.f32 %v184, 0.001953125
          %v186 = vmul.f32 %v183, %v183
          %v187 = vsub.f32 %v185, %v186
          %188 = vst.msk [vmem:[%s1] sm:$0xf] %vm164, %v183
          %v189 = vadd.f32 %v187, 1e-05
          %v190 = vrsqrt.pop %v189
          %191 = vst.msk [vmem:[%s2] sm:$0xf] %vm164, %v190
        $region36: #{tpu_custom_call.1} parent=23 // pred_fallthru
          _
        // Predicated region
        $region37: #{tpu_custom_call.1} parent=23 // pred_check
          %p192 = pneg %p56
        $region38: #{tpu_custom_call.1} parent=23 // pred_check_branch
          %194 = sbr.rel (%p192) target = $region40
        $region39: #{tpu_custom_call.1} parent=23 // pred_region
          _
        $region40: #{tpu_custom_call.1} parent=23 // pred_fallthru
          _
        // Predicated region
        $region41: #{tpu_custom_call.1} parent=23 // pred_check
          %p195 = pneg %p77
        $region42: #{tpu_custom_call.1} parent=23 // pred_check_branch
          %197 = sbr.rel (%p195) target = $region44
        $region43: #{tpu_custom_call.1} parent=23 // pred_region
          _
        $region44: #{tpu_custom_call.1} parent=23 // pred_fallthru
          _
        // Predicated region
        $region45: #{tpu_custom_call.1} parent=23 // pred_check
          %p198 = pneg %p56
        $region46: #{tpu_custom_call.1} parent=23 // pred_check_branch
          %200 = sbr.rel (%p198) target = $region48
        $region47: #{tpu_custom_call.1} parent=23 // pred_region
          _
        $region48: #{tpu_custom_call.1} parent=23 // pred_fallthru
          _
        // Predicated region
        $region49: #{tpu_custom_call.1} parent=23 // pred_check
          %p201 = pneg %p77
        $region50: #{tpu_custom_call.1} parent=23 // pred_check_branch
          %203 = sbr.rel (%p201) target = $region52
        $region51: #{tpu_custom_call.1} parent=23 // pred_region
          _
        $region52: #{tpu_custom_call.1} parent=23 // pred_fallthru
          _
      $region24: #{tpu_custom_call.1} parent=5 // pred_fallthru
        _
      %p204 = scmp.le.s32.totalorder 2, %s12
      // Predicated region
      $region53: #{tpu_custom_call.1} parent=5 // pred_check
        %p205 = pneg %p204
      $region54: #{tpu_custom_call.1} parent=5 // pred_check_branch
        %207 = sbr.rel (%p205) target = $region56
      $region55: #{tpu_custom_call.1} parent=5 // pred_region
        %s208 = ssub.s32 %s12, 2
      $region56: #{tpu_custom_call.1} parent=5 // pred_fallthru
        _
    $region6: #{tpu_custom_call.1} parent=1 // loop_footer
      %s16 = sadd.s32 1, %s12
    $region7: #{tpu_custom_call.1} parent=1 // loop_footer_branch
      %11 = sbr.rel target = $region3
    $region8: #{tpu_custom_call.1} parent=1 // loop_exit
      _
    %209 = vsyncpa [#allocation3], 1
    %s210 = scalar_lea.sflag [#allocation3], 1
    %211 = vsyncpa %s210, 1

</llo_original>
